<compile_context>
chip_gen: v7x
topology: tpu7x:2x2x1
jax: 0.10.0
libtpu: 0.0.40
codegen_flags: <defaults>
</compile_context>

<pallas_src>
import functools
import math

import jax
import jax.numpy as jnp
from jax import lax
from jax.experimental import pallas as pl
from jax.experimental.pallas import tpu as pltpu

_EPS = 1.1920929e-07   # torch.finfo(float32).eps (F.rms_norm default)
_NEG = -1.0e30         # finite mask value (avoids exp(-inf - (-inf)) NaNs)


def _rms(v):
    return v * lax.rsqrt(jnp.mean(v * v, axis=-1, keepdims=True) + _EPS)


# --------------------- Kernel A: residual scale + QKV + RoPE ---------------------
def _qkv_kernel(lam_ref, x_ref, wq_ref, wk_ref, wv_ref, cos_ref, sin_ref,
                x0_ref, q_ref, k_ref, v_ref, *, head_dim):
    half = head_dim // 2
    scale = 1.0 / math.sqrt(head_dim)

    x0 = x_ref[...].astype(jnp.float32) * lam_ref[0]      # Block.lambdas[0]
    x0_ref[...] = x0.astype(x0_ref.dtype)                 # idempotent across heads
    xn = _rms(x0).astype(jnp.bfloat16)                    # bf16 MXU operand

    # Heads live on the grid -> plain 2-D (tq, D) x (D, hd) matmuls, f32 accumulate.
    q = jnp.dot(xn, wq_ref[...], preferred_element_type=jnp.float32)
    k = jnp.dot(xn, wk_ref[...], preferred_element_type=jnp.float32)
    v = jnp.dot(xn, wv_ref[...], preferred_element_type=jnp.float32)
    v = v * lam_ref[1]                                    # CausalSelfAttention.lambdas[0]

    # Per-head RMS norm: plain lane-axis mean (no block-diag matmul trick).
    q = _rms(q)
    k = _rms(k)

    c = cos_ref[...]                                      # (tq, hd//2) f32
    s = sin_ref[...]

    def rope(t):                                          # half-split RoPE
        t1, t2 = t[:, :half], t[:, half:]
        return jnp.concatenate([t1 * c + t2 * s, t2 * c - t1 * s], axis=-1)

    q_ref[...] = (rope(q) * scale).astype(q_ref.dtype)    # 1/sqrt(hd) folded into q
    k_ref[...] = rope(k).astype(k_ref.dtype)
    v_ref[...] = v.astype(v_ref.dtype)


# --------- Kernel B: flash attention + output proj + residual + MLP ---------
def _attn_mlp_kernel(x0_ref, q_ref, k_ref, v_ref, wo_ref, fc_ref, pw_ref,
                     o_ref, m_sc, l_sc, acc_sc, *, tq, tkv):
    i = pl.program_id(0)   # query row tile
    j = pl.program_id(1)   # kv column tile

    @pl.when(j == 0)
    def _init():
        m_sc[...] = jnp.full(m_sc.shape, _NEG, dtype=m_sc.dtype)
        l_sc[...] = jnp.zeros(l_sc.shape, dtype=l_sc.dtype)
        acc_sc[...] = jnp.zeros(acc_sc.shape, dtype=acc_sc.dtype)

    # Skip kv tiles that are entirely above the causal diagonal.
    @pl.when(j * tkv < (i + 1) * tq)
    def _update():
        q = q_ref[...]                                    # (H, tq, hd)  bf16
        k = k_ref[...]                                    # (H, tkv, hd) bf16
        # Contract last dims directly (no k transpose), batched over heads.
        s = jnp.einsum('hqd,hkd->hqk', q, k,
                       preferred_element_type=jnp.float32)        # (H, tq, tkv) f32
        row = i * tq + lax.broadcasted_iota(jnp.int32, (tq, tkv), 0)
        col = j * tkv + lax.broadcasted_iota(jnp.int32, (tq, tkv), 1)
        s = jnp.where(col <= row, s, _NEG)                # per-tile causal mask

        m_prev = m_sc[...]
        m_new = jnp.maximum(m_prev, s.max(axis=-1, keepdims=True))
        alpha = jnp.exp(m_prev - m_new)
        p = jnp.exp(s - m_new)
        l_sc[...] = alpha * l_sc[...] + p.sum(axis=-1, keepdims=True)
        acc_sc[...] = alpha * acc_sc[...] + jnp.einsum(
            'hqk,hkd->hqd', p.astype(v_ref.dtype), v_ref[...],
            preferred_element_type=jnp.float32)
        m_sc[...] = m_new

    @pl.when(j == pl.num_programs(1) - 1)
    def _finalize():
        # Exact normalization (review: no approx reciprocal on the softmax denom).
        o = (acc_sc[...] / l_sc[...]).astype(jnp.bfloat16)        # (H, tq, hd)
        # Fused output projection: per-head matmul then a cheap VPU sum over heads.
        yh = jnp.einsum('hqd,hdo->hqo', o, wo_ref[...],
                        preferred_element_type=jnp.float32)       # (H, tq, D)
        y = jnp.sum(yh, axis=0)                                   # (tq, D)
        x = x0_ref[...] + y                                       # residual, f32
        xn = _rms(x).astype(jnp.bfloat16)
        h = jnp.dot(xn, fc_ref[...], preferred_element_type=jnp.float32)
        h = jnp.maximum(h, 0.0).astype(jnp.bfloat16)
        mlp_out = jnp.dot(h, pw_ref[...], preferred_element_type=jnp.float32)
        o_ref[...] = (x + mlp_out).astype(o_ref.dtype)


# ------------------------------ host-side wrappers ------------------------------
def prepare_block_params(params, *, num_heads, head_dim):
    """One-time weight layout prep (hoisted out of the per-step path)."""
    H, hd = num_heads, head_dim
    D = params["qkv_w"].shape[1]
    qkv = params["qkv_w"].reshape(3, H, hd, D)                      # (3, H, hd, D)
    wq = jnp.transpose(qkv[0], (0, 2, 1)).astype(jnp.bfloat16)      # (H, D, hd)
    wk = jnp.transpose(qkv[1], (0, 2, 1)).astype(jnp.bfloat16)
    wv = jnp.transpose(qkv[2], (0, 2, 1)).astype(jnp.bfloat16)
    wo = jnp.transpose(params["attn_proj_w"].reshape(D, H, hd),
                       (1, 2, 0)).astype(jnp.bfloat16)              # (H, hd, D)
    fc_wT = params["fc_w"].T.astype(jnp.bfloat16)                   # (D, mlp_h)
    mlp_pwT = params["mlp_proj_w"].T.astype(jnp.bfloat16)           # (mlp_h, D)
    lam = jnp.stack([jnp.asarray(params["block_lambda"], jnp.float32),
                     jnp.asarray(params["attn_lambda"], jnp.float32)])
    return dict(wq=wq, wk=wk, wv=wv, wo=wo, fc_wT=fc_wT, mlp_pwT=mlp_pwT, lam=lam)


def block_forward(x, prep, cos, sin, *, num_heads, head_dim, tq=8, tkv=8):
    B, T, D = x.shape
    assert B == 1, "Must use batch size = 1 (as in the FlexAttention path)"
    H, hd = num_heads, head_dim
    assert T % tq == 0 and T % tkv == 0
    nq, nkv = T // tq, T // tkv
    mlp_h = prep["fc_wT"].shape[1]

    xs = x[0]
    cos = cos.astype(jnp.float32)
    sin = sin.astype(jnp.float32)

    # ---- Kernel A: residual scale + norm + per-head QKV + RMS + RoPE ----
    x0, q, k, v = pl.pallas_call(
        functools.partial(_qkv_kernel, head_dim=hd),
        grid=(nq, H),
        in_specs=[
            pl.BlockSpec(memory_space=pltpu.MemorySpace.SMEM),            # lambdas
            pl.BlockSpec((tq, D), lambda i, h: (i, 0)),                   # x
            pl.BlockSpec((None, D, hd), lambda i, h: (h, 0, 0)),          # wq
            pl.BlockSpec((None, D, hd), lambda i, h: (h, 0, 0)),          # wk
            pl.BlockSpec((None, D, hd), lambda i, h: (h, 0, 0)),          # wv
            pl.BlockSpec((tq, hd // 2), lambda i, h: (i, 0)),             # cos
            pl.BlockSpec((tq, hd // 2), lambda i, h: (i, 0)),             # sin
        ],
        out_specs=[
            pl.BlockSpec((tq, D), lambda i, h: (i, 0)),                   # x0
            pl.BlockSpec((None, tq, hd), lambda i, h: (h, i, 0)),         # q
            pl.BlockSpec((None, tq, hd), lambda i, h: (h, i, 0)),         # k
            pl.BlockSpec((None, tq, hd), lambda i, h: (h, i, 0)),         # v
        ],
        out_shape=[
            jax.ShapeDtypeStruct((T, D), jnp.float32),
            jax.ShapeDtypeStruct((H, T, hd), jnp.bfloat16),
            jax.ShapeDtypeStruct((H, T, hd), jnp.bfloat16),
            jax.ShapeDtypeStruct((H, T, hd), jnp.bfloat16),
        ],
        compiler_params=pltpu.CompilerParams(
            dimension_semantics=("parallel", "arbitrary")),
    )(prep["lam"], xs, prep["wq"], prep["wk"], prep["wv"], cos, sin)

    # ---- Kernel B: flash attention + output proj + residual + MLP ----
    out = pl.pallas_call(
        functools.partial(_attn_mlp_kernel, tq=tq, tkv=tkv),
        grid=(nq, nkv),
        in_specs=[
            pl.BlockSpec((tq, D), lambda i, j: (i, 0)),                   # x0 residual
            pl.BlockSpec((H, tq, hd), lambda i, j: (0, i, 0)),            # q
            pl.BlockSpec((H, tkv, hd), lambda i, j: (0, j, 0)),           # k
            pl.BlockSpec((H, tkv, hd), lambda i, j: (0, j, 0)),           # v
            pl.BlockSpec((H, hd, D), lambda i, j: (0, 0, 0)),             # attn proj
            pl.BlockSpec((D, mlp_h), lambda i, j: (0, 0)),                # mlp fc
            pl.BlockSpec((mlp_h, D), lambda i, j: (0, 0)),                # mlp proj
        ],
        out_specs=pl.BlockSpec((tq, D), lambda i, j: (i, 0)),
        out_shape=jax.ShapeDtypeStruct((T, D), x.dtype),
        scratch_shapes=[
            pltpu.VMEM((H, tq, 1), jnp.float32),     # running max m
            pltpu.VMEM((H, tq, 1), jnp.float32),     # running sum l
            pltpu.VMEM((H, tq, hd), jnp.float32),    # un-normalized accumulator
        ],
        compiler_params=pltpu.CompilerParams(
            dimension_semantics=("parallel", "arbitrary")),
    )(x0, q, k, v, prep["wo"], prep["fc_wT"], prep["mlp_pwT"])
    return out[None]


# ---------------- pure-JAX reference (for correctness check) ----------------
def block_ref(x, params, cos, sin, *, num_heads, head_dim):
    def rms(v):
        return v * lax.rsqrt(jnp.mean(v * v, -1, keepdims=True) + _EPS)

    B, T, D = x.shape
    x = params["block_lambda"] * x
    xn = rms(x)
    qkv = xn @ params["qkv_w"].T
    qkv = qkv.reshape(B, T, 3 * num_heads, head_dim)
    q, k, v = (qkv[:, :, :num_heads],
               qkv[:, :, num_heads:2 * num_heads],
               qkv[:, :, 2 * num_heads:])
    q, k = rms(q), rms(k)

    def rope(t):
        t1, t2 = t[..., :head_dim // 2], t[..., head_dim // 2:]
        c = cos[None, :, None, :]
        s = sin[None, :, None, :]
        return jnp.concatenate([t1 * c + t2 * s, -t1 * s + t2 * c], -1)

    q, k = rope(q), rope(k)
    v = params["attn_lambda"] * v
    scale = 1.0 / math.sqrt(head_dim)
    qt, kt, vt = (a.transpose(0, 2, 1, 3) for a in (q, k, v))
    s = jnp.einsum("bhqd,bhkd->bhqk", qt, kt) * scale
    mask = jnp.tril(jnp.ones((T, T), bool))
    s = jnp.where(mask, s, -jnp.inf)
    p = jax.nn.softmax(s, -1)
    y = jnp.einsum("bhqk,bhkd->bhqd", p, vt).transpose(0, 2, 1, 3)
    y = y.reshape(B, T, num_heads * head_dim) @ params["attn_proj_w"].T
    x = x + y
    xn2 = rms(x)
    h = jnp.maximum(xn2 @ params["fc_w"].T, 0.0)
    return x + h @ params["mlp_proj_w"].T


def make_rotary_tables(head_dim, max_seq_len):
    # half-truncate RoPE: head_dim//4 real frequencies, head_dim//4 zeros
    n = head_dim // 4
    angular_freq = (1.0 / 1024.0) ** jnp.linspace(0.0, 1.0, n, dtype=jnp.float32)
    angular_freq = jnp.concatenate([angular_freq, jnp.zeros((n,), jnp.float32)])
    t = jnp.arange(max_seq_len, dtype=jnp.float32)
    theta = jnp.einsum("i,j->ij", t, angular_freq)
    return jnp.cos(theta), jnp.sin(theta)


if __name__ == "__main__":
    dim, num_heads, mlp_ratio, max_seq_len = 32, 4, 4, 16
    head_dim = dim // num_heads
    hdim = num_heads * head_dim
    mlp_hdim = mlp_ratio * dim
    B, T = 1, 16

    key = jax.random.PRNGKey(0)
    k_x, k_qkv, k_ap, k_fc, k_mp = jax.random.split(key, 5)

    std = 0.5 * dim ** -0.5
    bound = math.sqrt(3.0) * std
    qkv_w = jax.random.uniform(k_qkv, (3 * hdim, dim), jnp.float32,
                               minval=-bound, maxval=bound)
    # NOTE: the original module zero-inits c_proj weights; use small non-zero
    # weights so the kernel's hot path is actually exercised.
    attn_proj_w = 0.02 * jax.random.normal(k_ap, (dim, hdim), jnp.float32)
    fc_bound = 1.0 / math.sqrt(dim)
    fc_w = jax.random.uniform(k_fc, (mlp_hdim, dim), jnp.float32,
                              minval=-fc_bound, maxval=fc_bound)
    mlp_proj_w = 0.02 * jax.random.normal(k_mp, (dim, mlp_hdim), jnp.float32)

    params = dict(qkv_w=qkv_w, attn_proj_w=attn_proj_w, fc_w=fc_w,
                  mlp_proj_w=mlp_proj_w,
                  block_lambda=jnp.float32(1.0),   # Block.lambdas init
                  attn_lambda=jnp.float32(0.5))    # CausalSelfAttention.lambdas init

    cos, sin = make_rotary_tables(head_dim, max_seq_len)
    cos, sin = cos[:T], sin[:T]

    x = jax.random.normal(k_x, (B, T, dim), jnp.float32)

    prep = prepare_block_params(params, num_heads=num_heads, head_dim=head_dim)
    out = block_forward(x, prep, cos, sin,
                        num_heads=num_heads, head_dim=head_dim, tq=8, tkv=8)
    out = jax.block_until_ready(out)

    ref = block_ref(x, params, cos, sin,
                    num_heads=num_heads, head_dim=head_dim)
    assert out.shape == (B, T, dim)
    err = jnp.max(jnp.abs(out - ref))
    # bf16 MXU operands vs. the all-f32 reference -> looser tolerance than pure f32.
    assert jnp.allclose(out, ref, atol=2e-2, rtol=2e-2), f"max err {err}"
    print("KERNEL_OK")
</pallas_src>

<mosaic_0001>
module attributes {stable_mosaic.version = 11 : i64} {
  func.func @_qkv_kernel(%arg0: i32, %arg1: i32, %arg2: memref<2xf32, #tpu.memory_space<smem>>, %arg3: memref<8x32xf32, #tpu.memory_space<vmem>>, %arg4: memref<1x32x8xbf16, #tpu.memory_space<vmem>>, %arg5: memref<1x32x8xbf16, #tpu.memory_space<vmem>>, %arg6: memref<1x32x8xbf16, #tpu.memory_space<vmem>>, %arg7: memref<8x4xf32, #tpu.memory_space<vmem>>, %arg8: memref<8x4xf32, #tpu.memory_space<vmem>>, %arg9: memref<8x32xf32, #tpu.memory_space<vmem>>, %arg10: memref<1x8x8xbf16, #tpu.memory_space<vmem>>, %arg11: memref<1x8x8xbf16, #tpu.memory_space<vmem>>, %arg12: memref<1x8x8xbf16, #tpu.memory_space<vmem>>) attributes {dimension_semantics = [#tpu.dimension_semantics<parallel>, #tpu.dimension_semantics<arbitrary>], iteration_bounds = array<i64: 2, 4>, scalar_prefetch = 0 : i64, scratch_operands = 0 : i64, tpu.core_type = #tpu.core_type<tc>, window_params = [{transform_indices = @transform_0, window_bounds = array<i64: 2>}, {transform_indices = @transform_1, window_bounds = array<i64: 8, 32>}, {transform_indices = @transform_2, window_bounds = array<i64: 1, 32, 8>}, {transform_indices = @transform_3, window_bounds = array<i64: 1, 32, 8>}, {transform_indices = @transform_4, window_bounds = array<i64: 1, 32, 8>}, {transform_indices = @transform_5, window_bounds = array<i64: 8, 4>}, {transform_indices = @transform_6, window_bounds = array<i64: 8, 4>}, {transform_indices = @transform_7, window_bounds = array<i64: 8, 32>}, {transform_indices = @transform_8, window_bounds = array<i64: 1, 8, 8>}, {transform_indices = @transform_9, window_bounds = array<i64: 1, 8, 8>}, {transform_indices = @transform_10, window_bounds = array<i64: 1, 8, 8>}]} {
    %c0 = arith.constant 0 : index
    %c0_0 = arith.constant 0 : index
    %0 = vector.load %arg3[%c0, %c0_0] : memref<8x32xf32, #tpu.memory_space<vmem>>, vector<8x32xf32>
    %c0_1 = arith.constant 0 : index
    %1 = memref.load %arg2[%c0_1] : memref<2xf32, #tpu.memory_space<smem>>
    %2 = vector.broadcast %1 : f32 to vector<8x32xf32>
    %3 = arith.mulf %0, %2 : vector<8x32xf32>
    %c0_2 = arith.constant 0 : index
    %c0_3 = arith.constant 0 : index
    %4 = vector.load %arg9[%c0_2, %c0_3] : memref<8x32xf32, #tpu.memory_space<vmem>>, vector<8x32xf32>
    tpu.vector_store %arg9[%c0_2, %c0_3], %3 {strides = array<i32>} : memref<8x32xf32, #tpu.memory_space<vmem>>, vector<8x32xf32>,
    %5 = arith.mulf %3, %3 : vector<8x32xf32>
    %cst = arith.constant dense<0.000000e+00> : vector<8xf32>
    %6 = vector.multi_reduction <add>, %5, %cst [1] : vector<8x32xf32> to vector<8xf32>
    %7 = vector.shape_cast %6 : vector<8xf32> to vector<8x1xf32>
    %cst_4 = arith.constant 3.200000e+01 : f32
    %8 = vector.broadcast %cst_4 : f32 to vector<8x1xf32>
    %9 = arith.divf %7, %8 : vector<8x1xf32>
    %cst_5 = arith.constant 1.1920929E-7 : f32
    %10 = vector.broadcast %cst_5 : f32 to vector<8x1xf32>
    %11 = arith.addf %9, %10 : vector<8x1xf32>
    %12 = math.rsqrt %11 : vector<8x1xf32>
    %13 = vector.broadcast %12 : vector<8x1xf32> to vector<8x32xf32>
    %14 = arith.mulf %3, %13 : vector<8x32xf32>
    %15 = arith.truncf %14 : vector<8x32xf32> to vector<8x32xbf16>
    %c0_6 = arith.constant 0 : index
    %c0_7 = arith.constant 0 : index
    %c0_8 = arith.constant 0 : index
    %16 = vector.load %arg4[%c0_6, %c0_7, %c0_8] : memref<1x32x8xbf16, #tpu.memory_space<vmem>>, vector<1x32x8xbf16>
    %17 = vector.shape_cast %16 : vector<1x32x8xbf16> to vector<32x8xbf16>
    %cst_9 = arith.constant dense<0.000000e+00> : vector<8x8xf32>
    %18 = tpu.matmul %15, %17, %cst_9 {dimension_numbers = #tpu.dot_dimension_numbers<[1], [0], [0], [1], [0, 0, 1, 1], [], []>} : vector<8x32xbf16>, vector<32x8xbf16>, vector<8x8xf32> -> vector<8x8xf32>
    %c0_10 = arith.constant 0 : index
    %c0_11 = arith.constant 0 : index
    %c0_12 = arith.constant 0 : index
    %19 = vector.load %arg5[%c0_10, %c0_11, %c0_12] : memref<1x32x8xbf16, #tpu.memory_space<vmem>>, vector<1x32x8xbf16>
    %20 = vector.shape_cast %19 : vector<1x32x8xbf16> to vector<32x8xbf16>
    %cst_13 = arith.constant dense<0.000000e+00> : vector<8x8xf32>
    %21 = tpu.matmul %15, %20, %cst_13 {dimension_numbers = #tpu.dot_dimension_numbers<[1], [0], [0], [1], [0, 0, 1, 1], [], []>} : vector<8x32xbf16>, vector<32x8xbf16>, vector<8x8xf32> -> vector<8x8xf32>
    %c0_14 = arith.constant 0 : index
    %c0_15 = arith.constant 0 : index
    %c0_16 = arith.constant 0 : index
    %22 = vector.load %arg6[%c0_14, %c0_15, %c0_16] : memref<1x32x8xbf16, #tpu.memory_space<vmem>>, vector<1x32x8xbf16>
    %23 = vector.shape_cast %22 : vector<1x32x8xbf16> to vector<32x8xbf16>
    %cst_17 = arith.constant dense<0.000000e+00> : vector<8x8xf32>
    %24 = tpu.matmul %15, %23, %cst_17 {dimension_numbers = #tpu.dot_dimension_numbers<[1], [0], [0], [1], [0, 0, 1, 1], [], []>} : vector<8x32xbf16>, vector<32x8xbf16>, vector<8x8xf32> -> vector<8x8xf32>
    %c1 = arith.constant 1 : index
    %25 = memref.load %arg2[%c1] : memref<2xf32, #tpu.memory_space<smem>>
    %26 = vector.broadcast %25 : f32 to vector<8x8xf32>
    %27 = arith.mulf %24, %26 : vector<8x8xf32>
    %28 = arith.mulf %18, %18 : vector<8x8xf32>
    %cst_18 = arith.constant dense<0.000000e+00> : vector<8xf32>
    %29 = vector.multi_reduction <add>, %28, %cst_18 [1] : vector<8x8xf32> to vector<8xf32>
    %30 = vector.shape_cast %29 : vector<8xf32> to vector<8x1xf32>
    %cst_19 = arith.constant 8.000000e+00 : f32
    %31 = vector.broadcast %cst_19 : f32 to vector<8x1xf32>
    %32 = arith.divf %30, %31 : vector<8x1xf32>
    %cst_20 = arith.constant 1.1920929E-7 : f32
    %33 = vector.broadcast %cst_20 : f32 to vector<8x1xf32>
    %34 = arith.addf %32, %33 : vector<8x1xf32>
    %35 = math.rsqrt %34 : vector<8x1xf32>
    %36 = vector.broadcast %35 : vector<8x1xf32> to vector<8x8xf32>
    %37 = arith.mulf %18, %36 : vector<8x8xf32>
    %38 = arith.mulf %21, %21 : vector<8x8xf32>
    %cst_21 = arith.constant dense<0.000000e+00> : vector<8xf32>
    %39 = vector.multi_reduction <add>, %38, %cst_21 [1] : vector<8x8xf32> to vector<8xf32>
    %40 = vector.shape_cast %39 : vector<8xf32> to vector<8x1xf32>
    %cst_22 = arith.constant 8.000000e+00 : f32
    %41 = vector.broadcast %cst_22 : f32 to vector<8x1xf32>
    %42 = arith.divf %40, %41 : vector<8x1xf32>
    %cst_23 = arith.constant 1.1920929E-7 : f32
    %43 = vector.broadcast %cst_23 : f32 to vector<8x1xf32>
    %44 = arith.addf %42, %43 : vector<8x1xf32>
    %45 = math.rsqrt %44 : vector<8x1xf32>
    %46 = vector.broadcast %45 : vector<8x1xf32> to vector<8x8xf32>
    %47 = arith.mulf %21, %46 : vector<8x8xf32>
    %c0_24 = arith.constant 0 : index
    %c0_25 = arith.constant 0 : index
    %48 = vector.load %arg7[%c0_24, %c0_25] : memref<8x4xf32, #tpu.memory_space<vmem>>, vector<8x4xf32>
    %c0_26 = arith.constant 0 : index
    %c0_27 = arith.constant 0 : index
    %49 = vector.load %arg8[%c0_26, %c0_27] : memref<8x4xf32, #tpu.memory_space<vmem>>, vector<8x4xf32>
    %50 = vector.extract_strided_slice %37 {offsets = [0, 0], sizes = [8, 4], strides = [1, 1]} : vector<8x8xf32> to vector<8x4xf32>
    %51 = vector.extract_strided_slice %37 {offsets = [0, 4], sizes = [8, 4], strides = [1, 1]} : vector<8x8xf32> to vector<8x4xf32>
    %52 = arith.mulf %50, %48 : vector<8x4xf32>
    %53 = arith.mulf %51, %49 : vector<8x4xf32>
    %54 = arith.addf %52, %53 : vector<8x4xf32>
    %55 = arith.mulf %51, %48 : vector<8x4xf32>
    %56 = arith.mulf %50, %49 : vector<8x4xf32>
    %57 = arith.subf %55, %56 : vector<8x4xf32>
    %58 = tpu.concatenate %54, %57 in 1 : vector<8x4xf32>, vector<8x4xf32> -> vector<8x8xf32>
    %cst_28 = arith.constant 0.353553385 : f32
    %59 = vector.broadcast %cst_28 : f32 to vector<8x8xf32>
    %60 = arith.mulf %58, %59 : vector<8x8xf32>
    %61 = arith.truncf %60 : vector<8x8xf32> to vector<8x8xbf16>
    %c0_29 = arith.constant 0 : index
    %c0_30 = arith.constant 0 : index
    %c0_31 = arith.constant 0 : index
    %62 = vector.load %arg10[%c0_29, %c0_30, %c0_31] : memref<1x8x8xbf16, #tpu.memory_space<vmem>>, vector<1x8x8xbf16>
    %63 = vector.shape_cast %62 : vector<1x8x8xbf16> to vector<8x8xbf16>
    %64 = vector.shape_cast %61 : vector<8x8xbf16> to vector<1x8x8xbf16>
    tpu.vector_store %arg10[%c0_29, %c0_30, %c0_31], %64 {strides = array<i32>} : memref<1x8x8xbf16, #tpu.memory_space<vmem>>, vector<1x8x8xbf16>,
    %65 = vector.extract_strided_slice %47 {offsets = [0, 0], sizes = [8, 4], strides = [1, 1]} : vector<8x8xf32> to vector<8x4xf32>
    %66 = vector.extract_strided_slice %47 {offsets = [0, 4], sizes = [8, 4], strides = [1, 1]} : vector<8x8xf32> to vector<8x4xf32>
    %67 = arith.mulf %65, %48 : vector<8x4xf32>
    %68 = arith.mulf %66, %49 : vector<8x4xf32>
    %69 = arith.addf %67, %68 : vector<8x4xf32>
    %70 = arith.mulf %66, %48 : vector<8x4xf32>
    %71 = arith.mulf %65, %49 : vector<8x4xf32>
    %72 = arith.subf %70, %71 : vector<8x4xf32>
    %73 = tpu.concatenate %69, %72 in 1 : vector<8x4xf32>, vector<8x4xf32> -> vector<8x8xf32>
    %74 = arith.truncf %73 : vector<8x8xf32> to vector<8x8xbf16>
    %c0_32 = arith.constant 0 : index
    %c0_33 = arith.constant 0 : index
    %c0_34 = arith.constant 0 : index
    %75 = vector.load %arg11[%c0_32, %c0_33, %c0_34] : memref<1x8x8xbf16, #tpu.memory_space<vmem>>, vector<1x8x8xbf16>
    %76 = vector.shape_cast %75 : vector<1x8x8xbf16> to vector<8x8xbf16>
    %77 = vector.shape_cast %74 : vector<8x8xbf16> to vector<1x8x8xbf16>
    tpu.vector_store %arg11[%c0_32, %c0_33, %c0_34], %77 {strides = array<i32>} : memref<1x8x8xbf16, #tpu.memory_space<vmem>>, vector<1x8x8xbf16>,
    %78 = arith.truncf %27 : vector<8x8xf32> to vector<8x8xbf16>
    %c0_35 = arith.constant 0 : index
    %c0_36 = arith.constant 0 : index
    %c0_37 = arith.constant 0 : index
    %79 = vector.load %arg12[%c0_35, %c0_36, %c0_37] : memref<1x8x8xbf16, #tpu.memory_space<vmem>>, vector<1x8x8xbf16>
    %80 = vector.shape_cast %79 : vector<1x8x8xbf16> to vector<8x8xbf16>
    %81 = vector.shape_cast %78 : vector<8x8xbf16> to vector<1x8x8xbf16>
    tpu.vector_store %arg12[%c0_35, %c0_36, %c0_37], %81 {strides = array<i32>} : memref<1x8x8xbf16, #tpu.memory_space<vmem>>, vector<1x8x8xbf16>,
    return
  }
  func.func @transform_0(%arg0: i32, %arg1: i32) -> i32 {
    %c0_i32 = arith.constant 0 : i32
    %c0_i32_0 = arith.constant 0 : i32
    return %c0_i32 : i32
  }
  func.func @transform_1(%arg0: i32, %arg1: i32) -> (i32, i32) {
    %c0_i32 = arith.constant 0 : i32
    %c0_i32_0 = arith.constant 0 : i32
    return %arg0, %c0_i32 : i32, i32
  }
  func.func @transform_2(%arg0: i32, %arg1: i32) -> (i32, i32, i32) {
    %c0_i32 = arith.constant 0 : i32
    %c0_i32_0 = arith.constant 0 : i32
    %c0_i32_1 = arith.constant 0 : i32
    return %arg1, %c0_i32, %c0_i32_0 : i32, i32, i32
  }
  func.func @transform_3(%arg0: i32, %arg1: i32) -> (i32, i32, i32) {
    %c0_i32 = arith.constant 0 : i32
    %c0_i32_0 = arith.constant 0 : i32
    %c0_i32_1 = arith.constant 0 : i32
    return %arg1, %c0_i32, %c0_i32_0 : i32, i32, i32
  }
  func.func @transform_4(%arg0: i32, %arg1: i32) -> (i32, i32, i32) {
    %c0_i32 = arith.constant 0 : i32
    %c0_i32_0 = arith.constant 0 : i32
    %c0_i32_1 = arith.constant 0 : i32
    return %arg1, %c0_i32, %c0_i32_0 : i32, i32, i32
  }
  func.func @transform_5(%arg0: i32, %arg1: i32) -> (i32, i32) {
    %c0_i32 = arith.constant 0 : i32
    %c0_i32_0 = arith.constant 0 : i32
    return %arg0, %c0_i32 : i32, i32
  }
  func.func @transform_6(%arg0: i32, %arg1: i32) -> (i32, i32) {
    %c0_i32 = arith.constant 0 : i32
    %c0_i32_0 = arith.constant 0 : i32
    return %arg0, %c0_i32 : i32, i32
  }
  func.func @transform_7(%arg0: i32, %arg1: i32) -> (i32, i32) {
    %c0_i32 = arith.constant 0 : i32
    %c0_i32_0 = arith.constant 0 : i32
    return %arg0, %c0_i32 : i32, i32
  }
  func.func @transform_8(%arg0: i32, %arg1: i32) -> (i32, i32, i32) {
    %c0_i32 = arith.constant 0 : i32
    %c0_i32_0 = arith.constant 0 : i32
    return %arg1, %arg0, %c0_i32 : i32, i32, i32
  }
  func.func @transform_9(%arg0: i32, %arg1: i32) -> (i32, i32, i32) {
    %c0_i32 = arith.constant 0 : i32
    %c0_i32_0 = arith.constant 0 : i32
    return %arg1, %arg0, %c0_i32 : i32, i32, i32
  }
  func.func @transform_10(%arg0: i32, %arg1: i32) -> (i32, i32, i32) {
    %c0_i32 = arith.constant 0 : i32
    %c0_i32_0 = arith.constant 0 : i32
    return %arg1, %arg0, %c0_i32 : i32, i32, i32
  }
}

</mosaic_0001>

<llo_original>
// kernel: tpu_custom_call.1
$region0: #{tpu_custom_call.1}
  #allocation0 [shape = 'u32[]', space=smem, size = 0x4, offset = 0x4, fixed_abs, tag = 'smem constant byte address 0x4 - core index']
  #allocation1 [shape = 'u32[144,128]{1,0:T(1,128)}', space=vmem, size = 0x12000, scoped, tag = 'internal scratch']
  %s0 = inlined_call_operand.vmem [shape: f32[2], index: 0, kind: input, shape index: {}]
  %s1 = inlined_call_operand.vmem [shape: f32[16,32], index: 1, kind: input, shape index: {}]
  %s2 = inlined_call_operand.vmem [shape: bf16[4,32,8], index: 2, kind: input, shape index: {}]
  %s3 = inlined_call_operand.vmem [shape: bf16[4,32,8], index: 3, kind: input, shape index: {}]
  %s4 = inlined_call_operand.vmem [shape: bf16[4,32,8], index: 4, kind: input, shape index: {}]
  %s5 = inlined_call_operand.vmem [shape: f32[16,4], index: 5, kind: input, shape index: {}]
  %s6 = inlined_call_operand.vmem [shape: f32[16,4], index: 6, kind: input, shape index: {}]
  %s7 = inlined_call_operand.hbm [shape: f32[16,32], index: 7, kind: output, shape index: {0}]
  %s8 = inlined_call_operand.vmem [shape: bf16[4,16,8], index: 8, kind: output, shape index: {1}]
  %s9 = inlined_call_operand.vmem [shape: bf16[4,16,8], index: 9, kind: output, shape index: {2}]
  %s10 = inlined_call_operand.vmem [shape: bf16[4,16,8], index: 10, kind: output, shape index: {3}]
  %11 = xla_tuple %s7, %s8, %s9, %s10
  %s12 = sld [smem:[#allocation0]]
  $region89: #{tpu_custom_call.1} parent=0
    _
  %s14 = ssub.s32 1, %s12
  %s15 = scalar_select 0, %s14, %s12
  $region1: #{tpu_custom_call.1} parent=0
    #allocation2 [shape = 'u8[512]{0}', space=smem, size = 0x200, scoped, tag = 'input window, operand 0, single buffered']
    #allocation3 [shape = 's32[2]{0}', space=sflag, size = 0x8, scoped, tag = 'scoped memory for tpu_custom_call.1']
    #allocation4 [shape = 's32[2]{0}', space=sflag, size = 0x8, scoped, tag = 'scoped memory for tpu_custom_call.1']
    #allocation5 [shape = 'u8[8192]{0}', space=vmem, size = 0x2000, scoped, tag = 'output window, operand 0']
    %16 = vsyncpa [#allocation4], 0
    %17 = vsyncpa [#allocation3], 0
    %s18 = scalar_lea.sflag [#allocation3], 1
    %19 = vsyncpa %s18, 0
    loop: start=0, step=1, limit=10
    $region2: #{tpu_custom_call.1} parent=1 // loop_pre_header
      _
    $region3: #{tpu_custom_call.1} parent=1 // loop_header
      %s21 = sphi 0, %s25
      %p22 = scmp.ge.s32.totalorder %s21, 10
      %s28 = sphi 0, %s40
      %s29 = sphi 0, %s36
      %s30 = sphi 0, %s28
      %s31 = sphi 0, %s29
      %s32 = sphi 0, %s30
      %s33 = sphi 0, %s31
      %s41 = sphi 0, %s41
      %s43 = sphi 0, %s41
      %s44 = sphi 0, %s43
      %s58 = sphi 0, %s44
      %s64 = sphi 0, %s66
      %s67 = sphi 0, %s64
      %s68 = sphi 0, %s67
      %s84 = sphi 0, %s68
      %s90 = sphi 0, %s92
      %s93 = sphi 0, %s90
      %s94 = sphi 0, %s93
      %s110 = sphi 0, %s94
      %s116 = sphi 0, %s118
      %s119 = sphi 0, %s116
      %s120 = sphi 0, %s119
      %s136 = sphi 0, %s120
      %s142 = sphi 0, %s144
      %s145 = sphi 0, %s142
      %s146 = sphi 0, %s145
      %s162 = sphi 0, %s146
      %s168 = sphi 0, %s170
      %s171 = sphi 0, %s168
      %s172 = sphi 0, %s171
      %s188 = sphi 0, %s172
      %s194 = sphi 0, %s196
      %s197 = sphi 0, %s194
      %s198 = sphi 0, %s197
      %s214 = sphi 0, %s198
      %s220 = sphi 0, %s222
      %s223 = sphi 0, %s220
      %s224 = sphi 0, %s223
      %s240 = sphi 0, %s224
      %s248 = sphi 0, %s250
      %s251 = sphi 0, %s248
      %s252 = sphi 0, %s251
      %s268 = sphi 0, %s252
      %s276 = sphi 0, %s278
      %s279 = sphi 0, %s276
      %s280 = sphi 0, %s279
      %s296 = sphi 0, %s280
      %s304 = sphi 0, %s306
      %s307 = sphi 0, %s304
      %s308 = sphi 0, %s307
      %s324 = sphi 0, %s308
    $region4: #{tpu_custom_call.1} parent=1 // loop_header_branch
      %24 = sbr.rel (%p22) target = $region8
    $region5: #{tpu_custom_call.1} parent=1 // loop_body
      %s26 = ssub.s32 %s21, 1
      %s27 = ssub.s32 %s21, 2
      %s34 = sadd.s32 1, %s29
      %p35 = scmp.ge.s32.totalorder %s34, 4
      %s36 = scalar_select %p35, 0, %s34
      %s37 = sadd.s32 1, %s28
      %s38 = scalar_select %p35, %s37, %s28
      %p39 = scmp.ge.s32.totalorder %s38, 2
      %s40 = scalar_select %p39, 0, %s38
      %s42 = sadd.s32 %s41, 1
      %p45 = scmp.eq.s32.totalorder %s21, 7
      %p46 = scmp.ne.s32.totalorder %s41, %s43
      %p47 = scmp.eq.s32.totalorder %s21, 0
      %p48 = por %p46, %p47
      %p49 = scmp.ne.s32.totalorder %s41, %s43
      %p50 = scmp.eq.s32.totalorder %s26, 7
      %p51 = por %p49, %p50
      %p52 = scmp.ne.s32.totalorder %s43, %s44
      %p53 = scmp.eq.s32.totalorder %s26, 0
      %p54 = por %p52, %p53
      %p55 = scmp.ne.s32.totalorder %s43, %s44
      %p56 = scmp.eq.s32.totalorder %s27, 7
      %p57 = por %p55, %p56
      %p59 = scmp.ne.s32.totalorder %s44, %s58
      %p60 = scmp.eq.s32.totalorder %s27, 0
      %p61 = por %p59, %p60
      %s62 = ssub.s32 %s28, %s40
      %p63 = scmp.eq.s32.totalorder %s62, 0
      %s65 = sadd.s32 %s64, 1
      %s66 = scalar_select %p63, %s64, %s65
      %p69 = pneg %p63
      %p70 = scmp.eq.s32.totalorder %s21, 7
      %p71 = por %p69, %p70
      %p72 = scmp.ne.s32.totalorder %s64, %s67
      %p73 = scmp.eq.s32.totalorder %s21, 0
      %p74 = por %p72, %p73
      %p75 = scmp.ne.s32.totalorder %s64, %s67
      %p76 = scmp.eq.s32.totalorder %s26, 7
      %p77 = por %p75, %p76
      %p78 = scmp.ne.s32.totalorder %s67, %s68
      %p79 = scmp.eq.s32.totalorder %s26, 0
      %p80 = por %p78, %p79
      %p81 = scmp.ne.s32.totalorder %s67, %s68
      %p82 = scmp.eq.s32.totalorder %s27, 7
      %p83 = por %p81, %p82
      %p85 = scmp.ne.s32.totalorder %s68, %s84
      %p86 = scmp.eq.s32.totalorder %s27, 0
      %p87 = por %p85, %p86
      %s88 = ssub.s32 %s29, %s36
      %p89 = scmp.eq.s32.totalorder %s88, 0
      %s91 = sadd.s32 %s90, 1
      %s92 = scalar_select %p89, %s90, %s91
      %p95 = pneg %p89
      %p96 = scmp.eq.s32.totalorder %s21, 7
      %p97 = por %p95, %p96
      %p98 = scmp.ne.s32.totalorder %s90, %s93
      %p99 = scmp.eq.s32.totalorder %s21, 0
      %p100 = por %p98, %p99
      %p101 = scmp.ne.s32.totalorder %s90, %s93
      %p102 = scmp.eq.s32.totalorder %s26, 7
      %p103 = por %p101, %p102
      %p104 = scmp.ne.s32.totalorder %s93, %s94
      %p105 = scmp.eq.s32.totalorder %s26, 0
      %p106 = por %p104, %p105
      %p107 = scmp.ne.s32.totalorder %s93, %s94
      %p108 = scmp.eq.s32.totalorder %s27, 7
      %p109 = por %p107, %p108
      %p111 = scmp.ne.s32.totalorder %s94, %s110
      %p112 = scmp.eq.s32.totalorder %s27, 0
      %p113 = por %p111, %p112
      %s114 = ssub.s32 %s29, %s36
      %p115 = scmp.eq.s32.totalorder %s114, 0
      %s117 = sadd.s32 %s116, 1
      %s118 = scalar_select %p115, %s116, %s117
      %p121 = pneg %p115
      %p122 = scmp.eq.s32.totalorder %s21, 7
      %p123 = por %p121, %p122
      %p124 = scmp.ne.s32.totalorder %s116, %s119
      %p125 = scmp.eq.s32.totalorder %s21, 0
      %p126 = por %p124, %p125
      %p127 = scmp.ne.s32.totalorder %s116, %s119
      %p128 = scmp.eq.s32.totalorder %s26, 7
      %p129 = por %p127, %p128
      %p130 = scmp.ne.s32.totalorder %s119, %s120
      %p131 = scmp.eq.s32.totalorder %s26, 0
      %p132 = por %p130, %p131
      %p133 = scmp.ne.s32.totalorder %s119, %s120
      %p134 = scmp.eq.s32.totalorder %s27, 7
      %p135 = por %p133, %p134
      %p137 = scmp.ne.s32.totalorder %s120, %s136
      %p138 = scmp.eq.s32.totalorder %s27, 0
      %p139 = por %p137, %p138
      %s140 = ssub.s32 %s29, %s36
      %p141 = scmp.eq.s32.totalorder %s140, 0
      %s143 = sadd.s32 %s142, 1
      %s144 = scalar_select %p141, %s142, %s143
      %p147 = pneg %p141
      %p148 = scmp.eq.s32.totalorder %s21, 7
      %p149 = por %p147, %p148
      %p150 = scmp.ne.s32.totalorder %s142, %s145
      %p151 = scmp.eq.s32.totalorder %s21, 0
      %p152 = por %p150, %p151
      %p153 = scmp.ne.s32.totalorder %s142, %s145
      %p154 = scmp.eq.s32.totalorder %s26, 7
      %p155 = por %p153, %p154
      %p156 = scmp.ne.s32.totalorder %s145, %s146
      %p157 = scmp.eq.s32.totalorder %s26, 0
      %p158 = por %p156, %p157
      %p159 = scmp.ne.s32.totalorder %s145, %s146
      %p160 = scmp.eq.s32.totalorder %s27, 7
      %p161 = por %p159, %p160
      %p163 = scmp.ne.s32.totalorder %s146, %s162
      %p164 = scmp.eq.s32.totalorder %s27, 0
      %p165 = por %p163, %p164
      %s166 = ssub.s32 %s28, %s40
      %p167 = scmp.eq.s32.totalorder %s166, 0
      %s169 = sadd.s32 %s168, 1
      %s170 = scalar_select %p167, %s168, %s169
      %p173 = pneg %p167
      %p174 = scmp.eq.s32.totalorder %s21, 7
      %p175 = por %p173, %p174
      %p176 = scmp.ne.s32.totalorder %s168, %s171
      %p177 = scmp.eq.s32.totalorder %s21, 0
      %p178 = por %p176, %p177
      %p179 = scmp.ne.s32.totalorder %s168, %s171
      %p180 = scmp.eq.s32.totalorder %s26, 7
      %p181 = por %p179, %p180
      %p182 = scmp.ne.s32.totalorder %s171, %s172
      %p183 = scmp.eq.s32.totalorder %s26, 0
      %p184 = por %p182, %p183
      %p185 = scmp.ne.s32.totalorder %s171, %s172
      %p186 = scmp.eq.s32.totalorder %s27, 7
      %p187 = por %p185, %p186
      %p189 = scmp.ne.s32.totalorder %s172, %s188
      %p190 = scmp.eq.s32.totalorder %s27, 0
      %p191 = por %p189, %p190
      %s192 = ssub.s32 %s28, %s40
      %p193 = scmp.eq.s32.totalorder %s192, 0
      %s195 = sadd.s32 %s194, 1
      %s196 = scalar_select %p193, %s194, %s195
      %p199 = pneg %p193
      %p200 = scmp.eq.s32.totalorder %s21, 7
      %p201 = por %p199, %p200
      %p202 = scmp.ne.s32.totalorder %s194, %s197
      %p203 = scmp.eq.s32.totalorder %s21, 0
      %p204 = por %p202, %p203
      %p205 = scmp.ne.s32.totalorder %s194, %s197
      %p206 = scmp.eq.s32.totalorder %s26, 7
      %p207 = por %p205, %p206
      %p208 = scmp.ne.s32.totalorder %s197, %s198
      %p209 = scmp.eq.s32.totalorder %s26, 0
      %p210 = por %p208, %p209
      %p211 = scmp.ne.s32.totalorder %s197, %s198
      %p212 = scmp.eq.s32.totalorder %s27, 7
      %p213 = por %p211, %p212
      %p215 = scmp.ne.s32.totalorder %s198, %s214
      %p216 = scmp.eq.s32.totalorder %s27, 0
      %p217 = por %p215, %p216
      %s218 = ssub.s32 %s28, %s40
      %p219 = scmp.eq.s32.totalorder %s218, 0
      %s221 = sadd.s32 %s220, 1
      %s222 = scalar_select %p219, %s220, %s221
      %p225 = pneg %p219
      %p226 = scmp.eq.s32.totalorder %s21, 7
      %p227 = por %p225, %p226
      %p228 = scmp.ne.s32.totalorder %s220, %s223
      %p229 = scmp.eq.s32.totalorder %s21, 0
      %p230 = por %p228, %p229
      %p231 = scmp.ne.s32.totalorder %s220, %s223
      %p232 = scmp.eq.s32.totalorder %s26, 7
      %p233 = por %p231, %p232
      %p234 = scmp.ne.s32.totalorder %s223, %s224
      %p235 = scmp.eq.s32.totalorder %s26, 0
      %p236 = por %p234, %p235
      %p237 = scmp.ne.s32.totalorder %s223, %s224
      %p238 = scmp.eq.s32.totalorder %s27, 7
      %p239 = por %p237, %p238
      %p241 = scmp.ne.s32.totalorder %s224, %s240
      %p242 = scmp.eq.s32.totalorder %s27, 0
      %p243 = por %p241, %p242
      %s244 = ssub.s32 %s29, %s36
      %s245 = ssub.s32 %s28, %s40
      %s246 = sor.u32 %s244, %s245
      %p247 = scmp.eq.s32.totalorder %s246, 0
      %s249 = sadd.s32 %s248, 1
      %s250 = scalar_select %p247, %s248, %s249
      %p253 = pneg %p247
      %p254 = scmp.eq.s32.totalorder %s21, 7
      %p255 = por %p253, %p254
      %p256 = scmp.ne.s32.totalorder %s248, %s251
      %p257 = scmp.eq.s32.totalorder %s21, 0
      %p258 = por %p256, %p257
      %p259 = scmp.ne.s32.totalorder %s248, %s251
      %p260 = scmp.eq.s32.totalorder %s26, 7
      %p261 = por %p259, %p260
      %p262 = scmp.ne.s32.totalorder %s251, %s252
      %p263 = scmp.eq.s32.totalorder %s26, 0
      %p264 = por %p262, %p263
      %p265 = scmp.ne.s32.totalorder %s251, %s252
      %p266 = scmp.eq.s32.totalorder %s27, 7
      %p267 = por %p265, %p266
      %p269 = scmp.ne.s32.totalorder %s252, %s268
      %p270 = scmp.eq.s32.totalorder %s27, 0
      %p271 = por %p269, %p270
      %s272 = ssub.s32 %s29, %s36
      %s273 = ssub.s32 %s28, %s40
      %s274 = sor.u32 %s272, %s273
      %p275 = scmp.eq.s32.totalorder %s274, 0
      %s277 = sadd.s32 %s276, 1
      %s278 = scalar_select %p275, %s276, %s277
      %p281 = pneg %p275
      %p282 = scmp.eq.s32.totalorder %s21, 7
      %p283 = por %p281, %p282
      %p284 = scmp.ne.s32.totalorder %s276, %s279
      %p285 = scmp.eq.s32.totalorder %s21, 0
      %p286 = por %p284, %p285
      %p287 = scmp.ne.s32.totalorder %s276, %s279
      %p288 = scmp.eq.s32.totalorder %s26, 7
      %p289 = por %p287, %p288
      %p290 = scmp.ne.s32.totalorder %s279, %s280
      %p291 = scmp.eq.s32.totalorder %s26, 0
      %p292 = por %p290, %p291
      %p293 = scmp.ne.s32.totalorder %s279, %s280
      %p294 = scmp.eq.s32.totalorder %s27, 7
      %p295 = por %p293, %p294
      %p297 = scmp.ne.s32.totalorder %s280, %s296
      %p298 = scmp.eq.s32.totalorder %s27, 0
      %p299 = por %p297, %p298
      %s300 = ssub.s32 %s29, %s36
      %s301 = ssub.s32 %s28, %s40
      %s302 = sor.u32 %s300, %s301
      %p303 = scmp.eq.s32.totalorder %s302, 0
      %s305 = sadd.s32 %s304, 1
      %s306 = scalar_select %p303, %s304, %s305
      %p309 = pneg %p303
      %p310 = scmp.eq.s32.totalorder %s21, 7
      %p311 = por %p309, %p310
      %p312 = scmp.ne.s32.totalorder %s304, %s307
      %p313 = scmp.eq.s32.totalorder %s21, 0
      %p314 = por %p312, %p313
      %p315 = scmp.ne.s32.totalorder %s304, %s307
      %p316 = scmp.eq.s32.totalorder %s26, 7
      %p317 = por %p315, %p316
      %p318 = scmp.ne.s32.totalorder %s307, %s308
      %p319 = scmp.eq.s32.totalorder %s26, 0
      %p320 = por %p318, %p319
      %p321 = scmp.ne.s32.totalorder %s307, %s308
      %p322 = scmp.eq.s32.totalorder %s27, 7
      %p323 = por %p321, %p322
      %p325 = scmp.ne.s32.totalorder %s308, %s324
      %p326 = scmp.eq.s32.totalorder %s27, 0
      %p327 = por %p325, %p326
      %p328 = scmp.le.s32.totalorder 1, %s21
      %p329 = scmp.lt.s32.totalorder %s21, 9
      %p330 = pnand %p328, %p329
      %p331 = pneg %p330
      // Predicated region
      $region9: #{tpu_custom_call.1} parent=5 // pred_check
        _
      $region10: #{tpu_custom_call.1} parent=5 // pred_check_branch
        %333 = sbr.rel (%p330) target = $region12
      $region11: #{tpu_custom_call.1} parent=5 // pred_region
        %s334 = ssub.s32 %s21, 1
        // Predicated region
        $region13: #{tpu_custom_call.1} parent=11 // pred_check
          %p335 = pneg %p54
        $region14: #{tpu_custom_call.1} parent=11 // pred_check_branch
          %337 = sbr.rel (%p335) target = $region16
        $region15: #{tpu_custom_call.1} parent=11 // pred_region
          %s339 = ssub.s32 16, 16
          %340 = vsyncadd [#allocation4], %s339
          %s342 = sshll.u32 %s0, 4
          %s343 = int_to_ptr.vmem [resolvable:$true] %s342
          %345 = dma.vmem_to_smem %s343, 16, [#allocation2], [#allocation4]
        $region16: #{tpu_custom_call.1} parent=11 // pred_fallthru
          _
      $region12: #{tpu_custom_call.1} parent=5 // pred_fallthru
        _
      %p346 = scmp.lt.s32.totalorder %s21, 8
      // Predicated region
      $region17: #{tpu_custom_call.1} parent=5 // pred_check
        %p347 = pneg %p346
      $region18: #{tpu_custom_call.1} parent=5 // pred_check_branch
        %349 = sbr.rel (%p347) target = $region20
      $region19: #{tpu_custom_call.1} parent=5 // pred_region
        // Predicated region
        $region21: #{tpu_custom_call.1} parent=19 // pred_check
          %p350 = pneg %p74
        $region22: #{tpu_custom_call.1} parent=19 // pred_check_branch
          %352 = sbr.rel (%p350) target = $region24
        $region23: #{tpu_custom_call.1} parent=19 // pred_region
          %p353 = scmp.lt.s32.totalorder %s28, 1
          %s354 = scalar_select %p353, %s28, 1
          %s355 = smul.addr %s354, 8
          %s356 = scalar_lea.vmem %s1, %s355
        $region24: #{tpu_custom_call.1} parent=19 // pred_fallthru
          _
        // Predicated region
        $region25: #{tpu_custom_call.1} parent=19 // pred_check
          %p357 = pneg %p100
        $region26: #{tpu_custom_call.1} parent=19 // pred_check_branch
          %359 = sbr.rel (%p357) target = $region28
        $region27: #{tpu_custom_call.1} parent=19 // pred_region
          %p360 = scmp.lt.s32.totalorder %s29, 3
          %s361 = scalar_select %p360, %s29, 3
          %s362 = smul.addr %s361, 4
          %s363 = smul.addr %s362, 4
          %s364 = scalar_lea.vmem %s2, %s363
        $region28: #{tpu_custom_call.1} parent=19 // pred_fallthru
          _
        // Predicated region
        $region29: #{tpu_custom_call.1} parent=19 // pred_check
          %p365 = pneg %p126
        $region30: #{tpu_custom_call.1} parent=19 // pred_check_branch
          %367 = sbr.rel (%p365) target = $region32
        $region31: #{tpu_custom_call.1} parent=19 // pred_region
          %p368 = scmp.lt.s32.totalorder %s29, 3
          %s369 = scalar_select %p368, %s29, 3
          %s370 = smul.addr %s369, 4
          %s371 = smul.addr %s370, 4
          %s372 = scalar_lea.vmem %s3, %s371
        $region32: #{tpu_custom_call.1} parent=19 // pred_fallthru
          _
        // Predicated region
        $region33: #{tpu_custom_call.1} parent=19 // pred_check
          %p373 = pneg %p152
        $region34: #{tpu_custom_call.1} parent=19 // pred_check_branch
          %375 = sbr.rel (%p373) target = $region36
        $region35: #{tpu_custom_call.1} parent=19 // pred_region
          %p376 = scmp.lt.s32.totalorder %s29, 3
          %s377 = scalar_select %p376, %s29, 3
          %s378 = smul.addr %s377, 4
          %s379 = smul.addr %s378, 4
          %s380 = scalar_lea.vmem %s4, %s379
        $region36: #{tpu_custom_call.1} parent=19 // pred_fallthru
          _
        // Predicated region
        $region37: #{tpu_custom_call.1} parent=19 // pred_check
          %p381 = pneg %p178
        $region38: #{tpu_custom_call.1} parent=19 // pred_check_branch
          %383 = sbr.rel (%p381) target = $region40
        $region39: #{tpu_custom_call.1} parent=19 // pred_region
          %p384 = scmp.lt.s32.totalorder %s28, 1
          %s385 = scalar_select %p384, %s28, 1
          %s386 = smul.addr %s385, 8
          %s387 = scalar_lea.vmem %s5, %s386
        $region40: #{tpu_custom_call.1} parent=19 // pred_fallthru
          _
        // Predicated region
        $region41: #{tpu_custom_call.1} parent=19 // pred_check
          %p388 = pneg %p204
        $region42: #{tpu_custom_call.1} parent=19 // pred_check_branch
          %390 = sbr.rel (%p388) target = $region44
        $region43: #{tpu_custom_call.1} parent=19 // pred_region
          %p391 = scmp.lt.s32.totalorder %s28, 1
          %s392 = scalar_select %p391, %s28, 1
          %s393 = smul.addr %s392, 8
          %s394 = scalar_lea.vmem %s6, %s393
        $region44: #{tpu_custom_call.1} parent=19 // pred_fallthru
          _
      $region20: #{tpu_custom_call.1} parent=5 // pred_fallthru
        _
      %p395 = scmp.le.s32.totalorder 1, %s21
      %p396 = scmp.lt.s32.totalorder %s21, 9
      %p397 = pnand %p395, %p396
      %p398 = pneg %p397
      // Predicated region
      $region45: #{tpu_custom_call.1} parent=5 // pred_check
        _
      $region46: #{tpu_custom_call.1} parent=5 // pred_check_branch
        %400 = sbr.rel (%p397) target = $region48
      $region47: #{tpu_custom_call.1} parent=5 // pred_region
        %s401 = ssub.s32 %s21, 1
        // Predicated region
        $region49: #{tpu_custom_call.1} parent=47 // pred_check
          %p402 = pneg %p54
        $region50: #{tpu_custom_call.1} parent=47 // pred_check_branch
          %404 = sbr.rel (%p402) target = $region52
        $region51: #{tpu_custom_call.1} parent=47 // pred_region
          %405 = dma.done [#allocation4], 16
        $region52: #{tpu_custom_call.1} parent=47 // pred_fallthru
          _
        %406 = sfence
        %p407 = pneg %p54
        %p408 = pneg %p51
        %p409 = scmp.lt.s32.totalorder %s30, 1
        %s410 = scalar_select %p409, %s30, 1
        %s411 = smul.addr %s410, 8
        %s412 = scalar_lea.vmem %s1, %s411
        %p413 = pneg %p80
        %p414 = pneg %p77
        %p415 = scmp.lt.s32.totalorder %s31, 3
        %s416 = scalar_select %p415, %s31, 3
        %s417 = smul.addr %s416, 4
        %s418 = smul.addr %s417, 4
        %s419 = scalar_lea.vmem %s2, %s418
        %p420 = pneg %p106
        %p421 = pneg %p103
        %p422 = scmp.lt.s32.totalorder %s31, 3
        %s423 = scalar_select %p422, %s31, 3
        %s424 = smul.addr %s423, 4
        %s425 = smul.addr %s424, 4
        %s426 = scalar_lea.vmem %s3, %s425
        %p427 = pneg %p132
        %p428 = pneg %p129
        %p429 = scmp.lt.s32.totalorder %s31, 3
        %s430 = scalar_select %p429, %s31, 3
        %s431 = smul.addr %s430, 4
        %s432 = smul.addr %s431, 4
        %s433 = scalar_lea.vmem %s4, %s432
        %p434 = pneg %p158
        %p435 = pneg %p155
        %p436 = scmp.lt.s32.totalorder %s30, 1
        %s437 = scalar_select %p436, %s30, 1
        %s438 = smul.addr %s437, 8
        %s439 = scalar_lea.vmem %s5, %s438
        %p440 = pneg %p184
        %p441 = pneg %p181
        %p442 = scmp.lt.s32.totalorder %s30, 1
        %s443 = scalar_select %p442, %s30, 1
        %s444 = smul.addr %s443, 8
        %s445 = scalar_lea.vmem %s6, %s444
        %p446 = pneg %p210
        %p447 = pneg %p207
        %p448 = pneg %p236
        %p449 = pneg %p233
        %s450 = sand.u32 %s223, 1
        %s451 = scalar_lea.sflag [#allocation3], %s450
        %s452 = sand.u32 %s223, 1
        %s453 = smul.addr %s452, 8
        %s454 = scalar_lea.vmem [#allocation5], %s453
        %p455 = pneg %p264
        %p456 = pneg %p261
        %p457 = scmp.lt.s32.totalorder %s31, 3
        %s458 = scalar_select %p457, %s31, 3
        %p459 = scmp.lt.s32.totalorder %s30, 1
        %s460 = scalar_select %p459, %s30, 1
        %s461 = smul.addr %s458, 2
        %s462 = sadd.s32 %s460, %s461
        %s463 = smul.addr %s462, 4
        %s464 = scalar_lea.vmem %s8, %s463
        %p465 = pneg %p292
        %p466 = pneg %p289
        %p467 = scmp.lt.s32.totalorder %s31, 3
        %s468 = scalar_select %p467, %s31, 3
        %p469 = scmp.lt.s32.totalorder %s30, 1
        %s470 = scalar_select %p469, %s30, 1
        %s471 = smul.addr %s468, 2
        %s472 = sadd.s32 %s470, %s471
        %s473 = smul.addr %s472, 4
        %s474 = scalar_lea.vmem %s9, %s473
        %p475 = pneg %p320
        %p476 = pneg %p317
        %p477 = scmp.lt.s32.totalorder %s31, 3
        %s478 = scalar_select %p477, %s31, 3
        %p479 = scmp.lt.s32.totalorder %s30, 1
        %s480 = scalar_select %p479, %s30, 1
        %s481 = smul.addr %s478, 2
        %s482 = sadd.s32 %s480, %s481
        %s483 = smul.addr %s482, 4
        %s484 = scalar_lea.vmem %s10, %s483
        %p485 = scmp.lt.s32.totalorder %s30, 1
        %s486 = scalar_select %p485, %s30, 1
        %s487 = smul.addr %s486, 8
        %s488 = scalar_lea.vmem %s1, %s487
        %p489 = scmp.lt.s32.totalorder %s31, 3
        %s490 = scalar_select %p489, %s31, 3
        %s491 = smul.addr %s490, 4
        %s492 = smul.addr %s491, 4
        %s493 = scalar_lea.vmem %s2, %s492
        %p494 = scmp.lt.s32.totalorder %s31, 3
        %s495 = scalar_select %p494, %s31, 3
        %s496 = smul.addr %s495, 4
        %s497 = smul.addr %s496, 4
        %s498 = scalar_lea.vmem %s3, %s497
        %p499 = scmp.lt.s32.totalorder %s31, 3
        %s500 = scalar_select %p499, %s31, 3
        %s501 = smul.addr %s500, 4
        %s502 = smul.addr %s501, 4
        %s503 = scalar_lea.vmem %s4, %s502
        %p504 = scmp.lt.s32.totalorder %s30, 1
        %s505 = scalar_select %p504, %s30, 1
        %s506 = smul.addr %s505, 8
        %s507 = scalar_lea.vmem %s5, %s506
        %p508 = scmp.lt.s32.totalorder %s30, 1
        %s509 = scalar_select %p508, %s30, 1
        %s510 = smul.addr %s509, 8
        %s511 = scalar_lea.vmem %s6, %s510
        %p512 = scmp.lt.s32.totalorder %s31, 3
        %s513 = scalar_select %p512, %s31, 3
        %p514 = scmp.lt.s32.totalorder %s30, 1
        %s515 = scalar_select %p514, %s30, 1
        %s516 = smul.addr %s513, 2
        %s517 = sadd.s32 %s515, %s516
        %s518 = smul.addr %s517, 4
        %s519 = scalar_lea.vmem %s8, %s518
        %p520 = scmp.lt.s32.totalorder %s31, 3
        %s521 = scalar_select %p520, %s31, 3
        %p522 = scmp.lt.s32.totalorder %s30, 1
        %s523 = scalar_select %p522, %s30, 1
        %s524 = smul.addr %s521, 2
        %s525 = sadd.s32 %s523, %s524
        %s526 = smul.addr %s525, 4
        %s527 = scalar_lea.vmem %s9, %s526
        %p528 = scmp.lt.s32.totalorder %s31, 3
        %s529 = scalar_select %p528, %s31, 3
        %p530 = scmp.lt.s32.totalorder %s30, 1
        %s531 = scalar_select %p530, %s30, 1
        %s532 = smul.addr %s529, 2
        %s533 = sadd.s32 %s531, %s532
        %s534 = smul.addr %s533, 4
        %s535 = scalar_lea.vmem %s10, %s534
        %v537 = vld [vmem:[%s488] sm:$0xff]
        %s538 = sld [smem:[#allocation2]]
        %v539 = vstv %s538
        %v540 = vmul.f32 %v537, %v539
        %vm541 = vcmask 261120
        %542 = vst.msk [vmem:[%s454] sm:$0xff] %vm541, %v540
        %v543 = vmul.f32 %v540, %v540
        %v544 = vsel %vm541, %v543, 0.0
        %545 = vadd.xlane.f32.xlu0 %v544
        %v546 = vpop.xlane.xlu0 %545
        %v547 = vrcp.pop 32.0
        %v548 = vmul.f32 %v546, %v547
        %v549 = vadd.f32 %v548, 1.1920929e-07
        %v550 = vrsqrt.pop %v549
        %v551 = vmul.f32 %v540, %v550
        %v552 = vpack.c.bf16 %v551, %v551
        %v553 = vld [vmem:[%s493] sm:$0xf]
        %v554 = vld [vmem:[%s493 + $0x4] sm:$0xf]
        %v555 = vld [vmem:[%s493 + $0x8] sm:$0xf]
        %v556 = vld [vmem:[%s493 + $0xc] sm:$0xf]
        %v561 = vunpack.c.l.b16 %v553
        %v562 = vunpack.c.l.b16 %v554
        %v563 = vunpack.c.l.b16 %v555
        %v564 = vunpack.c.l.b16 %v556
        %v565 = vpack.c.b16 %v562, %v561
        %v566 = vpack.c.b16 %v564, %v563
        %v570 = vsel %vm541, %v552, 0
        %572 = vmatprep.subr.bf16.mxu0 0
        %573 = vmatpush1.bf16.msra.mxu0 %v565
        %574 = vmatprep.subr.bf16.mxu0 0
        %575 = vmatpush1.bf16.msra.mxu0 %v566
        %576 = vmatprep.subr.bf16.mxu0 0
        %577 = vmatpush1.bf16.msra.mxu0 0
        %578 = vmatprep.subr.bf16.mxu0 0
        %579 = vmatpush1.bf16.msra.mxu0 0
        %580 = vmatprep.subr.bf16.mxu0 0
        %581 = vmatpush1.bf16.msra.mxu0 0
        %582 = vmatprep.subr.bf16.mxu0 0
        %583 = vmatpush1.bf16.msra.mxu0 0
        %584 = vmatprep.subr.bf16.mxu0 0
        %585 = vmatpush1.bf16.msra.mxu0 0
        %586 = vmatprep.subr.bf16.mxu0 0
        %587 = vmatpush1.bf16.msra.mxu0 0
        %588 = vmatprep.subr.bf16.mxu0 0
        %589 = vmatpush1.bf16.msra.mxu0 0
        %590 = vmatprep.subr.bf16.mxu0 0
        %591 = vmatpush1.bf16.msra.mxu0 0
        %592 = vmatprep.subr.bf16.mxu0 0
        %593 = vmatpush1.bf16.msra.mxu0 0
        %594 = vmatprep.subr.bf16.mxu0 0
        %595 = vmatpush1.bf16.msra.mxu0 0
        %596 = vmatprep.subr.bf16.mxu0 0
        %597 = vmatpush1.bf16.msra.mxu0 0
        %598 = vmatprep.subr.bf16.mxu0 0
        %599 = vmatpush1.bf16.msra.mxu0 0
        %600 = vmatprep.subr.bf16.mxu0 0
        %601 = vmatpush1.bf16.msra.mxu0 0
        %602 = vmatprep.subr.bf16.mxu0 0
        %603 = vmatpush1.bf16.msra.mxu0 0
        %604 = vmatprep.mubr.bf16.mxu0 0
        %605 = vmatmul.mubr.bf16.gmra.mrb[0].mxu0 %v570
        %v606 = vpop.f32.mrb[0].mxu0
        %v607 = vadd.f32 0.0, %v606
        %v608 = vpop.f32.mrb[0].mxu0
        %v609 = vpop.f32.mrb[0].mxu0
        %v610 = vpop.f32.mrb[0].mxu0
        %611 = vdwg.mxu0
        %v612 = vld [vmem:[%s498] sm:$0xf]
        %v613 = vld [vmem:[%s498 + $0x4] sm:$0xf]
        %v614 = vld [vmem:[%s498 + $0x8] sm:$0xf]
        %v615 = vld [vmem:[%s498 + $0xc] sm:$0xf]
        %v620 = vunpack.c.l.b16 %v612
        %v621 = vunpack.c.l.b16 %v613
        %v622 = vunpack.c.l.b16 %v614
        %v623 = vunpack.c.l.b16 %v615
        %v624 = vpack.c.b16 %v621, %v620
        %v625 = vpack.c.b16 %v623, %v622
        %628 = vmatprep.subr.bf16.mxu0 0
        %629 = vmatpush1.bf16.msra.mxu0 %v624
        %630 = vmatprep.subr.bf16.mxu0 0
        %631 = vmatpush1.bf16.msra.mxu0 %v625
        %632 = vmatprep.subr.bf16.mxu0 0
        %633 = vmatpush1.bf16.msra.mxu0 0
        %634 = vmatprep.subr.bf16.mxu0 0
        %635 = vmatpush1.bf16.msra.mxu0 0
        %636 = vmatprep.subr.bf16.mxu0 0
        %637 = vmatpush1.bf16.msra.mxu0 0
        %638 = vmatprep.subr.bf16.mxu0 0
        %639 = vmatpush1.bf16.msra.mxu0 0
        %640 = vmatprep.subr.bf16.mxu0 0
        %641 = vmatpush1.bf16.msra.mxu0 0
        %642 = vmatprep.subr.bf16.mxu0 0
        %643 = vmatpush1.bf16.msra.mxu0 0
        %644 = vmatprep.subr.bf16.mxu0 0
        %645 = vmatpush1.bf16.msra.mxu0 0
        %646 = vmatprep.subr.bf16.mxu0 0
        %647 = vmatpush1.bf16.msra.mxu0 0
        %648 = vmatprep.subr.bf16.mxu0 0
        %649 = vmatpush1.bf16.msra.mxu0 0
        %650 = vmatprep.subr.bf16.mxu0 0
        %651 = vmatpush1.bf16.msra.mxu0 0
        %652 = vmatprep.subr.bf16.mxu0 0
        %653 = vmatpush1.bf16.msra.mxu0 0
        %654 = vmatprep.subr.bf16.mxu0 0
        %655 = vmatpush1.bf16.msra.mxu0 0
        %656 = vmatprep.subr.bf16.mxu0 0
        %657 = vmatpush1.bf16.msra.mxu0 0
        %658 = vmatprep.subr.bf16.mxu0 0
        %659 = vmatpush1.bf16.msra.mxu0 0
        %660 = vmatprep.mubr.bf16.mxu0 0
        %661 = vmatmul.mubr.bf16.gmra.mrb[0].mxu0 %v570
        %v662 = vpop.f32.mrb[0].mxu0
        %v663 = vadd.f32 0.0, %v662
        %v664 = vpop.f32.mrb[0].mxu0
        %v665 = vpop.f32.mrb[0].mxu0
        %v666 = vpop.f32.mrb[0].mxu0
        %667 = vdwg.mxu0
        %v668 = vld [vmem:[%s503] sm:$0xf]
        %v669 = vld [vmem:[%s503 + $0x4] sm:$0xf]
        %v670 = vld [vmem:[%s503 + $0x8] sm:$0xf]
        %v671 = vld [vmem:[%s503 + $0xc] sm:$0xf]
        %v676 = vunpack.c.l.b16 %v668
        %v677 = vunpack.c.l.b16 %v669
        %v678 = vunpack.c.l.b16 %v670
        %v679 = vunpack.c.l.b16 %v671
        %v680 = vpack.c.b16 %v677, %v676
        %v681 = vpack.c.b16 %v679, %v678
        %684 = vmatprep.subr.bf16.mxu0 0
        %685 = vmatpush1.bf16.msra.mxu0 %v680
        %686 = vmatprep.subr.bf16.mxu0 0
        %687 = vmatpush1.bf16.msra.mxu0 %v681
        %688 = vmatprep.subr.bf16.mxu0 0
        %689 = vmatpush1.bf16.msra.mxu0 0
        %690 = vmatprep.subr.bf16.mxu0 0
        %691 = vmatpush1.bf16.msra.mxu0 0
        %692 = vmatprep.subr.bf16.mxu0 0
        %693 = vmatpush1.bf16.msra.mxu0 0
        %694 = vmatprep.subr.bf16.mxu0 0
        %695 = vmatpush1.bf16.msra.mxu0 0
        %696 = vmatprep.subr.bf16.mxu0 0
        %697 = vmatpush1.bf16.msra.mxu0 0
        %698 = vmatprep.subr.bf16.mxu0 0
        %699 = vmatpush1.bf16.msra.mxu0 0
        %700 = vmatprep.subr.bf16.mxu0 0
        %701 = vmatpush1.bf16.msra.mxu0 0
        %702 = vmatprep.subr.bf16.mxu0 0
        %703 = vmatpush1.bf16.msra.mxu0 0
        %704 = vmatprep.subr.bf16.mxu0 0
        %705 = vmatpush1.bf16.msra.mxu0 0
        %706 = vmatprep.subr.bf16.mxu0 0
        %707 = vmatpush1.bf16.msra.mxu0 0
        %708 = vmatprep.subr.bf16.mxu0 0
        %709 = vmatpush1.bf16.msra.mxu0 0
        %710 = vmatprep.subr.bf16.mxu0 0
        %711 = vmatpush1.bf16.msra.mxu0 0
        %712 = vmatprep.subr.bf16.mxu0 0
        %713 = vmatpush1.bf16.msra.mxu0 0
        %714 = vmatprep.subr.bf16.mxu0 0
        %715 = vmatpush1.bf16.msra.mxu0 0
        %716 = vmatprep.mubr.bf16.mxu0 0
        %717 = vmatmul.mubr.bf16.gmra.mrb[0].mxu0 %v570
        %v718 = vpop.f32.mrb[0].mxu0
        %v719 = vadd.f32 0.0, %v718
        %v720 = vpop.f32.mrb[0].mxu0
        %v721 = vpop.f32.mrb[0].mxu0
        %v722 = vpop.f32.mrb[0].mxu0
        %723 = vdwg.mxu0
        %s724 = sld [smem:[#allocation2 + $0x1]]
        %v725 = vstv %s724
        %v726 = vmul.f32 %v719, %v725
        %v727 = vmul.f32 %v607, %v607
        %vm728 = vcmask 64512
        %v729 = vsel %vm728, %v727, 0.0
        %730 = vadd.xlane.f32.xlu0 %v729
        %v731 = vpop.xlane.xlu0 %730
        %v732 = vrcp.pop 8.0
        %v733 = vmul.f32 %v731, %v732
        %v734 = vadd.f32 %v733, 1.1920929e-07
        %v735 = vrsqrt.pop %v734
        %v736 = vmul.f32 %v607, %v735
        %v737 = vmul.f32 %v663, %v663
        %v738 = vsel %vm728, %v737, 0.0
        %739 = vadd.xlane.f32.xlu0 %v738
        %v740 = vpop.xlane.xlu0 %739
        %v741 = vmul.f32 %v740, %v732
        %v742 = vadd.f32 %v741, 1.1920929e-07
        %v743 = vrsqrt.pop %v742
        %v744 = vmul.f32 %v663, %v743
        %v745 = vld [vmem:[%s507] sm:$0xff]
        %v746 = vld [vmem:[%s511] sm:$0xff]
        %v747 = vmul.f32 %v736, %v745
        %749 = vrot.lane.b32.xlu0 %v746, 4
        %v750 = vpop.permute.xlu0 %749
        %v752 = vmul.f32 %v736, %v750
        %754 = vrot.lane.b32.xlu0 %v752, 124
        %v755 = vpop.permute.xlu0 %754
        %v757 = vadd.f32 %v747, %v755
        %759 = vrot.lane.b32.xlu0 %v745, 4
        %v760 = vpop.permute.xlu0 %759
        %v762 = vmul.f32 %v736, %v760
        %v763 = vmul.f32 %v736, %v746
        %765 = vrot.lane.b32.xlu0 %v763, 4
        %v766 = vpop.permute.xlu0 %765
        %v768 = vsub.f32 %v762, %v766
        %vm769 = vcmask 31744
        %v770 = vsel %vm769, %v757, %v768
        %v771 = vmul.f32 %v770, 0.35355338
        %v772 = vpack.c.bf16 %v771, %v771
        %vm773 = vcmask 60416
        %774 = vst.msk [vmem:[%s519] sm:$0xf] %vm773, %v772
        %v775 = vmul.f32 %v744, %v745
        %v776 = vmul.f32 %v744, %v750
        %778 = vrot.lane.b32.xlu0 %v776, 124
        %v779 = vpop.permute.xlu0 %778
        %v781 = vadd.f32 %v775, %v779
        %v782 = vmul.f32 %v744, %v760
        %v783 = vmul.f32 %v744, %v746
        %785 = vrot.lane.b32.xlu0 %v783, 4
        %v786 = vpop.permute.xlu0 %785
        %v788 = vsub.f32 %v782, %v786
        %v789 = vsel %vm769, %v781, %v788
        %v790 = vpack.c.bf16 %v789, %v789
        %791 = vst.msk [vmem:[%s527] sm:$0xf] %vm773, %v790
        %v792 = vpack.c.bf16 %v726, %v726
        %793 = vst.msk [vmem:[%s535] sm:$0xf] %vm773, %v792
        %s794 = sand.u32 %s223, 1
        %s795 = scalar_lea.sflag [#allocation3], %s794
        %s796 = sand.u32 %s223, 1
        %s797 = smul.addr %s796, 8
        %s798 = scalar_lea.vmem [#allocation5], %s797
        %p799 = scmp.lt.s32.totalorder %s31, 3
        %s800 = scalar_select %p799, %s31, 3
        %p801 = scmp.lt.s32.totalorder %s30, 1
        %s802 = scalar_select %p801, %s30, 1
        %s803 = smul.addr %s800, 2
        %s804 = sadd.s32 %s802, %s803
        %s805 = smul.addr %s804, 4
        %s806 = scalar_lea.vmem %s8, %s805
        %p807 = scmp.lt.s32.totalorder %s31, 3
        %s808 = scalar_select %p807, %s31, 3
        %p809 = scmp.lt.s32.totalorder %s30, 1
        %s810 = scalar_select %p809, %s30, 1
        %s811 = smul.addr %s808, 2
        %s812 = sadd.s32 %s810, %s811
        %s813 = smul.addr %s812, 4
        %s814 = scalar_lea.vmem %s9, %s813
        %p815 = scmp.lt.s32.totalorder %s31, 3
        %s816 = scalar_select %p815, %s31, 3
        %p817 = scmp.lt.s32.totalorder %s30, 1
        %s818 = scalar_select %p817, %s30, 1
        %s819 = smul.addr %s816, 2
        %s820 = sadd.s32 %s818, %s819
        %s821 = smul.addr %s820, 4
        %s822 = scalar_lea.vmem %s10, %s821
        // Predicated region
        $region53: #{tpu_custom_call.1} parent=47 // pred_check
          %p823 = pneg %p233
        $region54: #{tpu_custom_call.1} parent=47 // pred_check_branch
          %825 = sbr.rel (%p823) target = $region56
        $region55: #{tpu_custom_call.1} parent=47 // pred_region
          %s827 = ssub.s32 128, 128
          %828 = vsyncadd %s795, %s827
          %s829 = smul.addr %s30, 128
          %s830 = scalar_lea.hbm %s7, %s829
          %s832 = sshll.u32 %s798, 4
          %s833 = int_to_ptr.vmem [resolvable:$true] %s832
          %835 = dma.vmem_to_hbm [thread:$0]  %s833, 128, %s830, %s795
        $region56: #{tpu_custom_call.1} parent=47 // pred_fallthru
          _
        // Predicated region
        $region57: #{tpu_custom_call.1} parent=47 // pred_check
          %p836 = pneg %p261
        $region58: #{tpu_custom_call.1} parent=47 // pred_check_branch
          %838 = sbr.rel (%p836) target = $region60
        $region59: #{tpu_custom_call.1} parent=47 // pred_region
          _
        $region60: #{tpu_custom_call.1} parent=47 // pred_fallthru
          _
        // Predicated region
        $region61: #{tpu_custom_call.1} parent=47 // pred_check
          %p839 = pneg %p289
        $region62: #{tpu_custom_call.1} parent=47 // pred_check_branch
          %841 = sbr.rel (%p839) target = $region64
        $region63: #{tpu_custom_call.1} parent=47 // pred_region
          _
        $region64: #{tpu_custom_call.1} parent=47 // pred_fallthru
          _
        // Predicated region
        $region65: #{tpu_custom_call.1} parent=47 // pred_check
          %p842 = pneg %p317
        $region66: #{tpu_custom_call.1} parent=47 // pred_check_branch
          %844 = sbr.rel (%p842) target = $region68
        $region67: #{tpu_custom_call.1} parent=47 // pred_region
          _
        $region68: #{tpu_custom_call.1} parent=47 // pred_fallthru
          _
      $region48: #{tpu_custom_call.1} parent=5 // pred_fallthru
        _
      %p845 = scmp.le.s32.totalorder 2, %s21
      // Predicated region
      $region69: #{tpu_custom_call.1} parent=5 // pred_check
        %p846 = pneg %p845
      $region70: #{tpu_custom_call.1} parent=5 // pred_check_branch
        %848 = sbr.rel (%p846) target = $region72
      $region71: #{tpu_custom_call.1} parent=5 // pred_region
        %s849 = ssub.s32 %s21, 2
        // Predicated region
        $region73: #{tpu_custom_call.1} parent=71 // pred_check
          %p850 = pneg %p239
        $region74: #{tpu_custom_call.1} parent=71 // pred_check_branch
          %852 = sbr.rel (%p850) target = $region76
        $region75: #{tpu_custom_call.1} parent=71 // pred_region
          %s853 = sand.u32 %s224, 1
          %s854 = scalar_lea.sflag [#allocation3], %s853
          %s855 = sand.u32 %s224, 1
          %s856 = smul.addr %s855, 8
          %s857 = scalar_lea.vmem [#allocation5], %s856
          %858 = dma.done %s854, 128
        $region76: #{tpu_custom_call.1} parent=71 // pred_fallthru
          _
        // Predicated region
        $region77: #{tpu_custom_call.1} parent=71 // pred_check
          %p859 = pneg %p267
        $region78: #{tpu_custom_call.1} parent=71 // pred_check_branch
          %861 = sbr.rel (%p859) target = $region80
        $region79: #{tpu_custom_call.1} parent=71 // pred_region
          %p862 = scmp.lt.s32.totalorder %s33, 3
          %s863 = scalar_select %p862, %s33, 3
          %p864 = scmp.lt.s32.totalorder %s32, 1
          %s865 = scalar_select %p864, %s32, 1
          %s866 = smul.addr %s863, 2
          %s867 = sadd.s32 %s865, %s866
          %s868 = smul.addr %s867, 4
          %s869 = scalar_lea.vmem %s8, %s868
        $region80: #{tpu_custom_call.1} parent=71 // pred_fallthru
          _
        // Predicated region
        $region81: #{tpu_custom_call.1} parent=71 // pred_check
          %p870 = pneg %p295
        $region82: #{tpu_custom_call.1} parent=71 // pred_check_branch
          %872 = sbr.rel (%p870) target = $region84
        $region83: #{tpu_custom_call.1} parent=71 // pred_region
          %p873 = scmp.lt.s32.totalorder %s33, 3
          %s874 = scalar_select %p873, %s33, 3
          %p875 = scmp.lt.s32.totalorder %s32, 1
          %s876 = scalar_select %p875, %s32, 1
          %s877 = smul.addr %s874, 2
          %s878 = sadd.s32 %s876, %s877
          %s879 = smul.addr %s878, 4
          %s880 = scalar_lea.vmem %s9, %s879
        $region84: #{tpu_custom_call.1} parent=71 // pred_fallthru
          _
        // Predicated region
        $region85: #{tpu_custom_call.1} parent=71 // pred_check
          %p881 = pneg %p323
        $region86: #{tpu_custom_call.1} parent=71 // pred_check_branch
          %883 = sbr.rel (%p881) target = $region88
        $region87: #{tpu_custom_call.1} parent=71 // pred_region
          %p884 = scmp.lt.s32.totalorder %s33, 3
          %s885 = scalar_select %p884, %s33, 3
          %p886 = scmp.lt.s32.totalorder %s32, 1
          %s887 = scalar_select %p886, %s32, 1
          %s888 = smul.addr %s885, 2
          %s889 = sadd.s32 %s887, %s888
          %s890 = smul.addr %s889, 4
          %s891 = scalar_lea.vmem %s10, %s890
        $region88: #{tpu_custom_call.1} parent=71 // pred_fallthru
          _
      $region72: #{tpu_custom_call.1} parent=5 // pred_fallthru
        _
    $region6: #{tpu_custom_call.1} parent=1 // loop_footer
      %s25 = sadd.s32 1, %s21
    $region7: #{tpu_custom_call.1} parent=1 // loop_footer_branch
      %20 = sbr.rel target = $region3
    $region8: #{tpu_custom_call.1} parent=1 // loop_exit
      _
    %892 = vsyncpa [#allocation3], 1
    %s893 = scalar_lea.sflag [#allocation3], 1
    %894 = vsyncpa %s893, 1
    %895 = vsyncpa [#allocation4], 1
    %s896 = scalar_lea.sflag [#allocation4], 1
    %897 = vsyncpa %s896, 1

</llo_original>
